<compile_context>
chip_gen: v7x
topology: tpu7x:2x2x1
jax: 0.10.0
libtpu: 0.0.40
codegen_flags: <defaults>
</compile_context>

<pallas_src>
import numpy as np
import jax
import jax.numpy as jnp
from jax.experimental import pallas as pl
from jax.experimental.pallas import tpu as pltpu

# ----------------------------- model constants -----------------------------
NUM_BODY_JOINTS = 23
NUM_JOINTS = NUM_BODY_JOINTS + 1          # 24 (root + 23 body joints)
NUM_BETAS = 10
POSE_BASIS = NUM_BODY_JOINTS * 9          # 207
BLEND_K = NUM_BETAS + POSE_BASIS          # 217 (fused blendshape basis)
NUM_VERTS = 128                           # small synthetic vertex count (real SMPL: 6890)
LANE = 128                                # TPU lane width

BLEND_KP = ((BLEND_K + 15) // 16) * 16    # 224: K padded for bf16 sublane packing
BLEND_MAX_TILE = 4096                     # lane tile cap for the blend kernel
SKIN_MAX_TILE = 1024                      # lane tile cap for the skinning kernel

# standard SMPL kinematic tree (parents[0] = -1)
SMPL_PARENTS = np.array(
    [-1, 0, 0, 0, 1, 2, 3, 4, 5, 6, 7, 8, 9, 9, 9, 12, 13, 14, 16, 17, 18,
     19, 20, 21], dtype=np.int32)


# ------------------------------ tiling helpers ------------------------------
def _round_up(n, m):
    return ((n + m - 1) // m) * m


def _pad_for_tiling(n, max_tile):
    """Pad n to a multiple of LANE; when n is large, also to a multiple of some
    tile in (max_tile/2, max_tile], so a big lane tile always divides it."""
    nr = _round_up(n, LANE)
    if nr <= max_tile:
        return nr
    best = None
    t = max_tile
    while t > max_tile // 2:
        padded = _round_up(nr, t)
        if best is None or padded < best:
            best = padded
        t -= LANE
    return best


def _pick_tile(n, max_tile):
    """Largest multiple-of-LANE divisor of n that is <= max_tile."""
    assert n % LANE == 0
    best = LANE
    t = LANE
    cap = min(n, max_tile)
    while t <= cap:
        if n % t == 0:
            best = t
        t += LANE
    return best


def _vmem_limit_bytes(*stream_bytes):
    """Tight-but-safe scoped-VMEM limit: double-buffered streams + headroom."""
    footprint = 2 * sum(stream_bytes)
    return int(min(32 * 1024 * 1024, max(8 * 1024 * 1024, 4 * footprint)))


# ------------------------------ Pallas kernels ------------------------------
def blend_kernel(feat_ref, w_ref, vt_ref, out_ref):
    # out = v_template + [betas | pose_feature] @ [shapedirs ; posedirs]
    # feat/W are bf16 (HBM-stream halved), accumulation + template add in f32.
    out_ref[...] = vt_ref[...] + jnp.dot(
        feat_ref[...], w_ref[...], preferred_element_type=jnp.float32)


def skinning_kernel(a_ref, w_ref, v_ref, o_ref):
    # a_ref: (B*12, J)   top-3-rows of the per-joint 4x4 transforms, stacked
    # w_ref: (J, tile)   lbs_weights^T slice      (V on lanes)
    # v_ref: (B, 3, tile) posed vertices, xyz-major (V on lanes)
    # o_ref: (B, 3, tile) skinned vertices, xyz-major
    B = v_ref.shape[0]
    tile = w_ref.shape[1]
    # ONE stacked MXU matmul for all batches: (B*12, J) @ (J, tile).
    T = jnp.dot(a_ref[...], w_ref[...], preferred_element_type=jnp.float32)
    ones = jnp.ones((1, tile), jnp.float32)
    for b in range(B):                         # B is tiny & static (VPU work only)
        Tb = T[b * 12:(b + 1) * 12, :]         # (12, tile) static slice
        vb = v_ref[b]                          # (3, tile)
        vh = jnp.concatenate([vb, ones], axis=0)        # (4, tile)  [x;y;z;1]
        vh3 = jnp.concatenate([vh, vh, vh], axis=0)     # (12, tile)
        prod = Tb * vh3                                 # one wide (12,tile) VPU mul
        vx = jnp.sum(prod[0:4], axis=0, keepdims=True)  # sublane reduce (4->1)
        vy = jnp.sum(prod[4:8], axis=0, keepdims=True)
        vz = jnp.sum(prod[8:12], axis=0, keepdims=True)
        o_ref[b] = jnp.concatenate([vx, vy, vz], axis=0)


# ------------------------------ kernel wrappers ------------------------------
def blend_pallas(feat_b16, w_blend, vt_flat):
    """feat (B, KP) bf16, w_blend (KP, V3p) bf16, vt_flat (1, V3p) f32 -> (B, V3p) f32."""
    B, Kp = feat_b16.shape
    V3p = w_blend.shape[1]
    tile = _pick_tile(V3p, BLEND_MAX_TILE)   # padded layout guarantees a big tile
    limit = _vmem_limit_bytes(B * Kp * 2, Kp * tile * 2, tile * 4, B * tile * 4)
    return pl.pallas_call(
        blend_kernel,
        out_shape=jax.ShapeDtypeStruct((B, V3p), jnp.float32),
        grid_spec=pltpu.PrefetchScalarGridSpec(
            num_scalar_prefetch=0,
            grid=(V3p // tile,),
            in_specs=[
                pl.BlockSpec((B, Kp), lambda n: (0, 0)),        # small LHS, resident
                pl.BlockSpec((Kp, tile), lambda n: (0, n)),     # streamed bf16 slab
                pl.BlockSpec((1, tile), lambda n: (0, n)),      # f32 template slice
            ],
            out_specs=pl.BlockSpec((B, tile), lambda n: (0, n))),
        compiler_params=pltpu.CompilerParams(
            dimension_semantics=("parallel",),
            vmem_limit_bytes=limit),
    )(feat_b16, w_blend, vt_flat)


def skinning_pallas(a_stack, w_t, v_posed_t):
    """a_stack (B*12, J), w_t (J, Vp), v_posed_t (B, 3, Vp) -> (B, 3, Vp)."""
    BM, J = a_stack.shape
    B = v_posed_t.shape[0]
    Vp = w_t.shape[1]
    tile = _pick_tile(Vp, SKIN_MAX_TILE)
    limit = _vmem_limit_bytes(BM * J * 4, J * tile * 4,
                              B * 3 * tile * 4, B * 3 * tile * 4)
    return pl.pallas_call(
        skinning_kernel,
        out_shape=jax.ShapeDtypeStruct((B, 3, Vp), jnp.float32),
        grid_spec=pltpu.PrefetchScalarGridSpec(
            num_scalar_prefetch=0,
            grid=(Vp // tile,),
            in_specs=[
                pl.BlockSpec((BM, J), lambda n: (0, 0)),        # transforms, resident
                pl.BlockSpec((J, tile), lambda n: (0, n)),      # lbs weights slice
                pl.BlockSpec((B, 3, tile), lambda n: (0, 0, n)),  # posed verts slice
            ],
            out_specs=pl.BlockSpec((B, 3, tile), lambda n: (0, 0, n))),
        compiler_params=pltpu.CompilerParams(
            dimension_semantics=("parallel",),
            vmem_limit_bytes=limit),
    )(a_stack, w_t, v_posed_t)


# ------------------------------ plain-JAX glue ------------------------------
def batch_rodrigues(rot_vecs):
    """Axis-angle (N, 3) -> rotation matrices (N, 3, 3). Matches smplx."""
    angle = jnp.linalg.norm(rot_vecs + 1e-8, axis=1, keepdims=True)   # (N,1)
    rot_dir = rot_vecs / angle
    cos = jnp.cos(angle)[:, None]                                     # (N,1,1)
    sin = jnp.sin(angle)[:, None]
    rx = rot_dir[:, 0:1]
    ry = rot_dir[:, 1:2]
    rz = rot_dir[:, 2:3]
    zeros = jnp.zeros_like(rx)
    K = jnp.concatenate(
        [zeros, -rz, ry, rz, zeros, -rx, -ry, rx, zeros], axis=1
    ).reshape(-1, 3, 3)
    ident = jnp.eye(3, dtype=rot_vecs.dtype)[None]
    return ident + sin * K + (1.0 - cos) * jnp.matmul(K, K)


def transform_mat(R, t):
    """R: (..., 3, 3), t: (..., 3, 1) -> (..., 4, 4)."""
    top = jnp.concatenate([R, t], axis=-1)
    bottom = jnp.broadcast_to(
        jnp.array([0.0, 0.0, 0.0, 1.0], dtype=R.dtype),
        top.shape[:-2] + (1, 4))
    return jnp.concatenate([top, bottom], axis=-2)


def batch_rigid_transform(rot_mats, joints, parents):
    """rot_mats (B,N,3,3), joints (B,N,3) -> posed joints (B,N,3), A (B,N,4,4)."""
    B, N = joints.shape[0], joints.shape[1]
    joints = joints[..., None]                                   # (B,N,3,1)
    rel_joints = jnp.concatenate(
        [joints[:, :1], joints[:, 1:] - joints[:, parents[1:]]], axis=1)
    transforms_mat = transform_mat(rot_mats, rel_joints)         # (B,N,4,4)
    chain = [transforms_mat[:, 0]]
    for i in range(1, N):
        chain.append(jnp.matmul(chain[int(parents[i])], transforms_mat[:, i]))
    transforms = jnp.stack(chain, axis=1)
    posed_joints = transforms[:, :, :3, 3]
    joints_h = jnp.concatenate(
        [joints, jnp.zeros((B, N, 1, 1), joints.dtype)], axis=2)  # (B,N,4,1)
    tj = jnp.matmul(transforms, joints_h)                         # (B,N,4,1)
    padded = jnp.concatenate(
        [jnp.zeros((B, N, 4, 3), joints.dtype), tj], axis=-1)
    rel_transforms = transforms - padded
    return posed_joints, rel_transforms


# ------------------------------ SMPL parameters ------------------------------
def make_smpl_params(key, num_verts=NUM_VERTS):
    """Deterministic synthetic SMPL buffers (stand-in for the .pkl load),
    plus pre-arranged, lane-friendly kernel operands."""
    # TODO(synk): real SMPL loads these buffers from the pickle; synthetic here.
    V = num_verts
    Vp = _pad_for_tiling(V, SKIN_MAX_TILE)          # skin lane axis
    pad_v = Vp - V
    V3 = 3 * Vp
    V3p = _pad_for_tiling(V3, BLEND_MAX_TILE)       # blend lane axis (never tile-128 fallback)
    pad3 = V3p - V3

    ks = jax.random.split(key, 5)
    v_template = 0.1 * jax.random.normal(ks[0], (V, 3), jnp.float32)
    shapedirs = 0.01 * jax.random.normal(ks[1], (V, 3, NUM_BETAS), jnp.float32)
    # stored posedirs is already reshaped/transposed to (207, V*3) in __init__
    posedirs = 0.01 * jax.random.normal(ks[2], (POSE_BASIS, V * 3), jnp.float32)
    J_regressor = jax.nn.softmax(
        jax.random.normal(ks[3], (NUM_JOINTS, V), jnp.float32), axis=1)
    lbs_weights = jax.nn.softmax(
        jax.random.normal(ks[4], (V, NUM_JOINTS), jnp.float32), axis=1)

    # ---- kernel-1 operands: fused weight slab, xyz-major (col = k*Vp + v) ----
    v_template_p = jnp.pad(v_template, ((0, pad_v), (0, 0)))
    shapedirs_p = jnp.pad(shapedirs, ((0, pad_v), (0, 0), (0, 0)))
    posedirs_p = jnp.pad(posedirs.reshape(POSE_BASIS, V, 3),
                         ((0, 0), (0, pad_v), (0, 0)))
    W_shape = shapedirs_p.transpose(2, 1, 0).reshape(NUM_BETAS, V3)
    W_pose = posedirs_p.transpose(0, 2, 1).reshape(POSE_BASIS, V3)
    W_blend = jnp.concatenate([W_shape, W_pose], axis=0)           # (217, 3*Vp)
    # pad K 217->224 (bf16 sublane packing) and lanes 3*Vp->V3p, cast to bf16
    W_blend = jnp.pad(W_blend, ((0, BLEND_KP - BLEND_K), (0, pad3)))
    W_blend = W_blend.astype(jnp.bfloat16)                         # (224, V3p)
    # v_template stays f32 (full-precision template add in the kernel)
    v_template_kflat = jnp.pad(v_template_p.T.reshape(1, V3),
                               ((0, 0), (0, pad3)))                # (1, V3p) f32

    # ---- kernel-2 operand: V on the lane axis ----
    lbs_weights_T = jnp.pad(lbs_weights, ((0, pad_v), (0, 0))).T   # (24, Vp)

    # ---- tiny rest-pose joint regressors (plain-JAX glue) ----
    J_template = J_regressor @ v_template                          # (24, 3)
    J_shapedirs = jnp.einsum('ji,ikl->jkl', J_regressor, shapedirs)  # (24, 3, 10)

    return dict(
        # raw buffers (used by the pure-JAX reference)
        v_template=v_template, shapedirs=shapedirs, posedirs=posedirs,
        J_regressor=J_regressor, lbs_weights=lbs_weights,
        # pre-arranged kernel operands
        W_blend=W_blend, v_template_kflat=v_template_kflat,
        lbs_weights_T=lbs_weights_T,
        J_template=J_template, J_shapedirs=J_shapedirs)


# ------------------------------ SMPL forward --------------------------------
def smpl_forward(params, betas, global_orient, body_pose, transl=None):
    """Mirrors SMPL.forward(...) semantics (pose2rot=True, return_verts=True)."""
    full_pose = jnp.concatenate([global_orient, body_pose], axis=1)  # (B, 72)
    B = betas.shape[0]
    V = params['v_template'].shape[0]
    Vp = params['lbs_weights_T'].shape[1]

    rot_mats = batch_rodrigues(full_pose.reshape(-1, 3)).reshape(
        B, NUM_JOINTS, 3, 3)
    ident = jnp.eye(3, dtype=jnp.float32)
    pose_feature = (rot_mats[:, 1:] - ident).reshape(B, -1)          # (B, 207)
    feat = jnp.concatenate([betas, pose_feature], axis=1)            # (B, 217)
    feat_b16 = jnp.pad(feat, ((0, 0), (0, BLEND_KP - BLEND_K))).astype(jnp.bfloat16)

    # rest-pose joints: exact linearization, tiny (24x3x10) -> plain JAX
    J_rest = params['J_template'][None] + jnp.einsum(
        'bl,jkl->bjk', betas, params['J_shapedirs'])                 # (B, 24, 3)

    # Pallas kernel 1: fused shape+pose blendshapes, lane-tiled over padded 3*Vp
    v_posed_flat = blend_pallas(
        feat_b16, params['W_blend'], params['v_template_kflat'])     # (B, V3p)
    v_posed_t = v_posed_flat[:, :3 * Vp].reshape(B, 3, Vp)           # xyz-major

    # kinematic chain (24 joints) stays in plain JAX
    J_transformed, A = batch_rigid_transform(rot_mats, J_rest, SMPL_PARENTS)

    # Pallas kernel 2: lane-tiled linear blend skinning
    # stack the top-3 rows of each 4x4 transform: (B, 24, 3, 4) -> (B*12, 24)
    A12 = A[:, :, :3, :].reshape(B, NUM_JOINTS, 12)
    a_stack = A12.transpose(0, 2, 1).reshape(B * 12, NUM_JOINTS)
    verts_t = skinning_pallas(a_stack, params['lbs_weights_T'], v_posed_t)  # (B,3,Vp)
    verts = verts_t[:, :, :V].transpose(0, 2, 1)                     # (B, V, 3)

    joints = J_transformed
    if transl is not None:
        joints = joints + transl[:, None, :]
        verts = verts + transl[:, None, :]
    return dict(vertices=verts, joints=joints, betas=betas,
                full_pose=rot_mats, transl=transl, T=None, A=A)


# ------------------------------ pure-JAX reference ---------------------------
def smpl_forward_reference(params, betas, global_orient, body_pose, transl=None):
    full_pose = jnp.concatenate([global_orient, body_pose], axis=1)
    B = betas.shape[0]
    V = params['v_template'].shape[0]
    blend_shape = jnp.einsum('bl,mkl->bmk', betas, params['shapedirs'])
    v_shaped = params['v_template'][None] + blend_shape
    J = jnp.einsum('bik,ji->bjk', v_shaped, params['J_regressor'])
    rot_mats = batch_rodrigues(full_pose.reshape(-1, 3)).reshape(
        B, NUM_JOINTS, 3, 3)
    pose_feature = (rot_mats[:, 1:] - jnp.eye(3)).reshape(B, -1)
    pose_offsets = jnp.matmul(pose_feature, params['posedirs']).reshape(B, -1, 3)
    v_posed = pose_offsets + v_shaped
    J_transformed, A = batch_rigid_transform(rot_mats, J, SMPL_PARENTS)
    W = jnp.broadcast_to(params['lbs_weights'][None],
                         (B,) + params['lbs_weights'].shape)
    T = jnp.matmul(W, A.reshape(B, NUM_JOINTS, 16)).reshape(B, V, 4, 4)
    v_posed_homo = jnp.concatenate([v_posed, jnp.ones((B, V, 1))], axis=2)
    v_homo = jnp.matmul(T, v_posed_homo[..., None])
    verts = v_homo[:, :, :3, 0]
    joints = J_transformed
    if transl is not None:
        joints = joints + transl[:, None, :]
        verts = verts + transl[:, None, :]
    return verts, joints


# ----------------------------------- main ------------------------------------
if __name__ == "__main__":
    key = jax.random.PRNGKey(0)
    k_params, k_betas, k_go, k_bp, k_tr = jax.random.split(key, 5)

    B = 2
    params = make_smpl_params(k_params, num_verts=NUM_VERTS)

    betas = 0.5 * jax.random.normal(k_betas, (B, NUM_BETAS), jnp.float32)
    global_orient = 0.3 * jax.random.normal(k_go, (B, 3), jnp.float32)
    body_pose = 0.3 * jax.random.normal(k_bp, (B, NUM_BODY_JOINTS * 3), jnp.float32)
    transl = 0.1 * jax.random.normal(k_tr, (B, 3), jnp.float32)

    out = jax.jit(smpl_forward)(params, betas, global_orient, body_pose, transl)
    jax.block_until_ready(out['vertices'])

    verts_ref, joints_ref = smpl_forward_reference(
        params, betas, global_orient, body_pose, transl)

    np.testing.assert_allclose(np.asarray(out['vertices']),
                               np.asarray(verts_ref), rtol=1e-2, atol=1e-3)
    np.testing.assert_allclose(np.asarray(out['joints']),
                               np.asarray(joints_ref), rtol=1e-2, atol=1e-3)

    assert out['vertices'].shape == (B, NUM_VERTS, 3)
    assert out['joints'].shape == (B, NUM_JOINTS, 3)
    assert out['full_pose'].shape == (B, NUM_JOINTS, 3, 3)
    assert out['A'].shape == (B, NUM_JOINTS, 4, 4)

    print("KERNEL_OK")
</pallas_src>

<mosaic_0001>
module attributes {stable_mosaic.version = 11 : i64} {
  func.func @blend_kernel(%arg0: i32, %arg1: memref<2x224xbf16, #tpu.memory_space<vmem>>, %arg2: memref<224x384xbf16, #tpu.memory_space<vmem>>, %arg3: memref<1x384xf32, #tpu.memory_space<vmem>>, %arg4: memref<2x384xf32, #tpu.memory_space<vmem>>) attributes {dimension_semantics = [#tpu.dimension_semantics<parallel>], iteration_bounds = array<i64: 1>, scalar_prefetch = 0 : i64, scratch_operands = 0 : i64, tpu.core_type = #tpu.core_type<tc>, window_params = [{pipeline_mode = #tpu.pipeline_mode<synchronous>, transform_indices = @transform_0, window_bounds = array<i64: 2, 224>}, {transform_indices = @transform_1, window_bounds = array<i64: 224, 384>}, {transform_indices = @transform_2, window_bounds = array<i64: 1, 384>}, {transform_indices = @transform_3, window_bounds = array<i64: 2, 384>}]} {
    %c0 = arith.constant 0 : index
    %c0_0 = arith.constant 0 : index
    %0 = vector.load %arg3[%c0, %c0_0] : memref<1x384xf32, #tpu.memory_space<vmem>>, vector<1x384xf32>
    %c0_1 = arith.constant 0 : index
    %c0_2 = arith.constant 0 : index
    %1 = vector.load %arg1[%c0_1, %c0_2] : memref<2x224xbf16, #tpu.memory_space<vmem>>, vector<2x224xbf16>
    %c0_3 = arith.constant 0 : index
    %c0_4 = arith.constant 0 : index
    %2 = vector.load %arg2[%c0_3, %c0_4] : memref<224x384xbf16, #tpu.memory_space<vmem>>, vector<224x384xbf16>
    %cst = arith.constant dense<0.000000e+00> : vector<2x384xf32>
    %3 = tpu.matmul %1, %2, %cst {dimension_numbers = #tpu.dot_dimension_numbers<[1], [0], [0], [1], [0, 0, 1, 1], [], []>} : vector<2x224xbf16>, vector<224x384xbf16>, vector<2x384xf32> -> vector<2x384xf32>
    %4 = vector.broadcast %0 : vector<1x384xf32> to vector<2x384xf32>
    %5 = arith.addf %4, %3 : vector<2x384xf32>
    %c0_5 = arith.constant 0 : index
    %c0_6 = arith.constant 0 : index
    %6 = vector.load %arg4[%c0_5, %c0_6] : memref<2x384xf32, #tpu.memory_space<vmem>>, vector<2x384xf32>
    tpu.vector_store %arg4[%c0_5, %c0_6], %5 {strides = array<i32>} : memref<2x384xf32, #tpu.memory_space<vmem>>, vector<2x384xf32>,
    return
  }
  func.func @transform_0(%arg0: i32) -> (i32, i32) {
    %c0_i32 = arith.constant 0 : i32
    %c0_i32_0 = arith.constant 0 : i32
    %c0_i32_1 = arith.constant 0 : i32
    return %c0_i32, %c0_i32_0 : i32, i32
  }
  func.func @transform_1(%arg0: i32) -> (i32, i32) {
    %c0_i32 = arith.constant 0 : i32
    %c0_i32_0 = arith.constant 0 : i32
    return %c0_i32, %arg0 : i32, i32
  }
  func.func @transform_2(%arg0: i32) -> (i32, i32) {
    %c0_i32 = arith.constant 0 : i32
    %c0_i32_0 = arith.constant 0 : i32
    return %c0_i32, %arg0 : i32, i32
  }
  func.func @transform_3(%arg0: i32) -> (i32, i32) {
    %c0_i32 = arith.constant 0 : i32
    %c0_i32_0 = arith.constant 0 : i32
    return %c0_i32, %arg0 : i32, i32
  }
}

module attributes {stable_mosaic.version = 11 : i64} {
  func.func @skinning_kernel(%arg0: i32, %arg1: memref<24x24xf32, #tpu.memory_space<vmem>>, %arg2: memref<24x128xf32, #tpu.memory_space<vmem>>, %arg3: memref<2x3x128xf32, #tpu.memory_space<vmem>>, %arg4: memref<2x3x128xf32, #tpu.memory_space<vmem>>) attributes {dimension_semantics = [#tpu.dimension_semantics<parallel>], iteration_bounds = array<i64: 1>, scalar_prefetch = 0 : i64, scratch_operands = 0 : i64, tpu.core_type = #tpu.core_type<tc>, window_params = [{pipeline_mode = #tpu.pipeline_mode<synchronous>, transform_indices = @transform_0, window_bounds = array<i64: 24, 24>}, {transform_indices = @transform_1, window_bounds = array<i64: 24, 128>}, {transform_indices = @transform_2, window_bounds = array<i64: 2, 3, 128>}, {transform_indices = @transform_3, window_bounds = array<i64: 2, 3, 128>}]} {
    %c0 = arith.constant 0 : index
    %c0_0 = arith.constant 0 : index
    %0 = vector.load %arg1[%c0, %c0_0] : memref<24x24xf32, #tpu.memory_space<vmem>>, vector<24x24xf32>
    %c0_1 = arith.constant 0 : index
    %c0_2 = arith.constant 0 : index
    %1 = vector.load %arg2[%c0_1, %c0_2] : memref<24x128xf32, #tpu.memory_space<vmem>>, vector<24x128xf32>
    %cst = arith.constant dense<0.000000e+00> : vector<24x128xf32>
    %2 = tpu.matmul %0, %1, %cst {dimension_numbers = #tpu.dot_dimension_numbers<[1], [0], [0], [1], [0, 0, 1, 1], [], []>} : vector<24x24xf32>, vector<24x128xf32>, vector<24x128xf32> -> vector<24x128xf32>
    %cst_3 = arith.constant 1.000000e+00 : f32
    %3 = vector.broadcast %cst_3 : f32 to vector<1x128xf32>
    %4 = vector.extract_strided_slice %2 {offsets = [0, 0], sizes = [12, 128], strides = [1, 1]} : vector<24x128xf32> to vector<12x128xf32>
    %c0_4 = arith.constant 0 : index
    %c0_5 = arith.constant 0 : index
    %c0_6 = arith.constant 0 : index
    %5 = vector.load %arg3[%c0_4, %c0_5, %c0_6] : memref<2x3x128xf32, #tpu.memory_space<vmem>>, vector<1x3x128xf32>
    %6 = vector.shape_cast %5 : vector<1x3x128xf32> to vector<3x128xf32>
    %7 = tpu.concatenate %6, %3 in 0 : vector<3x128xf32>, vector<1x128xf32> -> vector<4x128xf32>
    %8 = tpu.concatenate %7, %7, %7 in 0 : vector<4x128xf32>, vector<4x128xf32>, vector<4x128xf32> -> vector<12x128xf32>
    %9 = arith.mulf %4, %8 : vector<12x128xf32>
    %10 = vector.extract_strided_slice %9 {offsets = [0, 0], sizes = [4, 128], strides = [1, 1]} : vector<12x128xf32> to vector<4x128xf32>
    %cst_7 = arith.constant dense<0.000000e+00> : vector<128xf32>
    %11 = vector.multi_reduction <add>, %10, %cst_7 [0] : vector<4x128xf32> to vector<128xf32>
    %12 = vector.shape_cast %11 : vector<128xf32> to vector<1x128xf32>
    %13 = vector.extract_strided_slice %9 {offsets = [4, 0], sizes = [4, 128], strides = [1, 1]} : vector<12x128xf32> to vector<4x128xf32>
    %cst_8 = arith.constant dense<0.000000e+00> : vector<128xf32>
    %14 = vector.multi_reduction <add>, %13, %cst_8 [0] : vector<4x128xf32> to vector<128xf32>
    %15 = vector.shape_cast %14 : vector<128xf32> to vector<1x128xf32>
    %16 = vector.extract_strided_slice %9 {offsets = [8, 0], sizes = [4, 128], strides = [1, 1]} : vector<12x128xf32> to vector<4x128xf32>
    %cst_9 = arith.constant dense<0.000000e+00> : vector<128xf32>
    %17 = vector.multi_reduction <add>, %16, %cst_9 [0] : vector<4x128xf32> to vector<128xf32>
    %18 = vector.shape_cast %17 : vector<128xf32> to vector<1x128xf32>
    %19 = tpu.concatenate %12, %15, %18 in 0 : vector<1x128xf32>, vector<1x128xf32>, vector<1x128xf32> -> vector<3x128xf32>
    %c0_10 = arith.constant 0 : index
    %c0_11 = arith.constant 0 : index
    %c0_12 = arith.constant 0 : index
    %20 = vector.load %arg4[%c0_10, %c0_11, %c0_12] : memref<2x3x128xf32, #tpu.memory_space<vmem>>, vector<1x3x128xf32>
    %21 = vector.shape_cast %20 : vector<1x3x128xf32> to vector<3x128xf32>
    %22 = vector.shape_cast %19 : vector<3x128xf32> to vector<1x3x128xf32>
    tpu.vector_store %arg4[%c0_10, %c0_11, %c0_12], %22 {strides = array<i32>} : memref<2x3x128xf32, #tpu.memory_space<vmem>>, vector<1x3x128xf32>,
    %23 = vector.extract_strided_slice %2 {offsets = [12, 0], sizes = [12, 128], strides = [1, 1]} : vector<24x128xf32> to vector<12x128xf32>
    %c1 = arith.constant 1 : index
    %c0_13 = arith.constant 0 : index
    %c0_14 = arith.constant 0 : index
    %24 = vector.load %arg3[%c1, %c0_13, %c0_14] : memref<2x3x128xf32, #tpu.memory_space<vmem>>, vector<1x3x128xf32>
    %25 = vector.shape_cast %24 : vector<1x3x128xf32> to vector<3x128xf32>
    %26 = tpu.concatenate %25, %3 in 0 : vector<3x128xf32>, vector<1x128xf32> -> vector<4x128xf32>
    %27 = tpu.concatenate %26, %26, %26 in 0 : vector<4x128xf32>, vector<4x128xf32>, vector<4x128xf32> -> vector<12x128xf32>
    %28 = arith.mulf %23, %27 : vector<12x128xf32>
    %29 = vector.extract_strided_slice %28 {offsets = [0, 0], sizes = [4, 128], strides = [1, 1]} : vector<12x128xf32> to vector<4x128xf32>
    %cst_15 = arith.constant dense<0.000000e+00> : vector<128xf32>
    %30 = vector.multi_reduction <add>, %29, %cst_15 [0] : vector<4x128xf32> to vector<128xf32>
    %31 = vector.shape_cast %30 : vector<128xf32> to vector<1x128xf32>
    %32 = vector.extract_strided_slice %28 {offsets = [4, 0], sizes = [4, 128], strides = [1, 1]} : vector<12x128xf32> to vector<4x128xf32>
    %cst_16 = arith.constant dense<0.000000e+00> : vector<128xf32>
    %33 = vector.multi_reduction <add>, %32, %cst_16 [0] : vector<4x128xf32> to vector<128xf32>
    %34 = vector.shape_cast %33 : vector<128xf32> to vector<1x128xf32>
    %35 = vector.extract_strided_slice %28 {offsets = [8, 0], sizes = [4, 128], strides = [1, 1]} : vector<12x128xf32> to vector<4x128xf32>
    %cst_17 = arith.constant dense<0.000000e+00> : vector<128xf32>
    %36 = vector.multi_reduction <add>, %35, %cst_17 [0] : vector<4x128xf32> to vector<128xf32>
    %37 = vector.shape_cast %36 : vector<128xf32> to vector<1x128xf32>
    %38 = tpu.concatenate %31, %34, %37 in 0 : vector<1x128xf32>, vector<1x128xf32>, vector<1x128xf32> -> vector<3x128xf32>
    %c1_18 = arith.constant 1 : index
    %c0_19 = arith.constant 0 : index
    %c0_20 = arith.constant 0 : index
    %39 = vector.load %arg4[%c1_18, %c0_19, %c0_20] : memref<2x3x128xf32, #tpu.memory_space<vmem>>, vector<1x3x128xf32>
    %40 = vector.shape_cast %39 : vector<1x3x128xf32> to vector<3x128xf32>
    %41 = vector.shape_cast %38 : vector<3x128xf32> to vector<1x3x128xf32>
    tpu.vector_store %arg4[%c1_18, %c0_19, %c0_20], %41 {strides = array<i32>} : memref<2x3x128xf32, #tpu.memory_space<vmem>>, vector<1x3x128xf32>,
    return
  }
  func.func @transform_0(%arg0: i32) -> (i32, i32) {
    %c0_i32 = arith.constant 0 : i32
    %c0_i32_0 = arith.constant 0 : i32
    %c0_i32_1 = arith.constant 0 : i32
    return %c0_i32, %c0_i32_0 : i32, i32
  }
  func.func @transform_1(%arg0: i32) -> (i32, i32) {
    %c0_i32 = arith.constant 0 : i32
    %c0_i32_0 = arith.constant 0 : i32
    return %c0_i32, %arg0 : i32, i32
  }
  func.func @transform_2(%arg0: i32) -> (i32, i32, i32) {
    %c0_i32 = arith.constant 0 : i32
    %c0_i32_0 = arith.constant 0 : i32
    %c0_i32_1 = arith.constant 0 : i32
    return %c0_i32, %c0_i32_0, %arg0 : i32, i32, i32
  }
  func.func @transform_3(%arg0: i32) -> (i32, i32, i32) {
    %c0_i32 = arith.constant 0 : i32
    %c0_i32_0 = arith.constant 0 : i32
    %c0_i32_1 = arith.constant 0 : i32
    return %c0_i32, %c0_i32_0, %arg0 : i32, i32, i32
  }
}

</mosaic_0001>

<llo_original>
// kernel: smpl_forward.2
$region0: #{smpl_forward.2}
  #allocation0 [shape = 'u32[]', space=smem, size = 0x4, offset = 0x4, fixed_abs, tag = 'smem constant byte address 0x4 - core index']
  #allocation1 [shape = 'u32[144,128]{1,0:T(1,128)}', space=vmem, size = 0x12000, scoped, tag = 'internal scratch']
  %s0 = inlined_call_operand.vmem [shape: bf16[2,224], index: 0, kind: input, shape index: {}]
  %s1 = inlined_call_operand.vmem [shape: bf16[224,384], index: 1, kind: input, shape index: {}]
  %s2 = inlined_call_operand.vmem [shape: f32[1,384], index: 2, kind: input, shape index: {}]
  %s3 = inlined_call_operand.vmem [shape: f32[2,384], index: 3, kind: output, shape index: {}]
  %s4 = sld [smem:[#allocation0]]
  $region22: #{smpl_forward.2} parent=0
    _
  %s6 = ssub.s32 1, %s4
  %s7 = scalar_select 0, %s6, %s4
  // Predicated region
  $region2: #{smpl_forward.2} parent=0 // pred_check
    _
  $region3: #{smpl_forward.2} parent=0 // pred_check_branch
    %9 = sbr.rel (0) target = $region5
  $region4: #{smpl_forward.2} parent=0 // pred_region
    _
  $region5: #{smpl_forward.2} parent=0 // pred_fallthru
    _
  // Predicated region
  $region6: #{smpl_forward.2} parent=0 // pred_check
    _
  $region7: #{smpl_forward.2} parent=0 // pred_check_branch
    %11 = sbr.rel (0) target = $region9
  $region8: #{smpl_forward.2} parent=0 // pred_region
    _
  $region9: #{smpl_forward.2} parent=0 // pred_fallthru
    _
  // Predicated region
  $region10: #{smpl_forward.2} parent=0 // pred_check
    _
  $region11: #{smpl_forward.2} parent=0 // pred_check_branch
    %13 = sbr.rel (0) target = $region13
  $region12: #{smpl_forward.2} parent=0 // pred_region
    _
  $region13: #{smpl_forward.2} parent=0 // pred_fallthru
    _
  %v15 = vld [vmem:[%s2] sm:$0x7]
  %v16 = vld [vmem:[%s0] sm:$0x3]
  %v17 = vld [vmem:[%s1] sm:$0xff]
  %v18 = vld [vmem:[%s1 + $0x8] sm:$0xf]
  %v19 = vld [vmem:[%s1 + $0xc] sm:$0xff]
  %v20 = vld [vmem:[%s1 + $0x14] sm:$0xf]
  %v21 = vld [vmem:[%s1 + $0x18] sm:$0xff]
  %v22 = vld [vmem:[%s1 + $0x20] sm:$0xf]
  %v23 = vld [vmem:[%s1 + $0x24] sm:$0xff]
  %v24 = vld [vmem:[%s1 + $0x2c] sm:$0xf]
  %v25 = vld [vmem:[%s1 + $0x30] sm:$0xff]
  %v26 = vld [vmem:[%s1 + $0x38] sm:$0xf]
  %v27 = vld [vmem:[%s1 + $0x3c] sm:$0xff]
  %v28 = vld [vmem:[%s1 + $0x44] sm:$0xf]
  %v29 = vld [vmem:[%s1 + $0x48] sm:$0xff]
  %v30 = vld [vmem:[%s1 + $0x50] sm:$0xf]
  %v31 = vld [vmem:[%s1 + $0x54] sm:$0xff]
  %v32 = vld [vmem:[%s1 + $0x5c] sm:$0xf]
  %v33 = vld [vmem:[%s1 + $0x60] sm:$0xff]
  %v34 = vld [vmem:[%s1 + $0x68] sm:$0xf]
  %v35 = vld [vmem:[%s1 + $0x6c] sm:$0xff]
  %v36 = vld [vmem:[%s1 + $0x74] sm:$0xf]
  %v37 = vld [vmem:[%s1 + $0x78] sm:$0xff]
  %v38 = vld [vmem:[%s1 + $0x80] sm:$0xf]
  %v39 = vld [vmem:[%s1 + $0x84] sm:$0xff]
  %v40 = vld [vmem:[%s1 + $0x8c] sm:$0xf]
  %v41 = vld [vmem:[%s1 + $0x90] sm:$0xff]
  %v42 = vld [vmem:[%s1 + $0x98] sm:$0xf]
  %v43 = vld [vmem:[%s1 + $0x9c] sm:$0xff]
  %v44 = vld [vmem:[%s1 + $0xa4] sm:$0xf]
  %v45 = vld [vmem:[%s1 + $0xa8] sm:$0xff]
  %v46 = vld [vmem:[%s1 + $0xb0] sm:$0xf]
  %v47 = vld [vmem:[%s1 + $0xb4] sm:$0xff]
  %v48 = vld [vmem:[%s1 + $0xbc] sm:$0xf]
  %v49 = vld [vmem:[%s1 + $0xc0] sm:$0xff]
  %v50 = vld [vmem:[%s1 + $0xc8] sm:$0xf]
  %v51 = vld [vmem:[%s1 + $0xcc] sm:$0xff]
  %v52 = vld [vmem:[%s1 + $0xd4] sm:$0xf]
  %v53 = vld [vmem:[%s1 + $0xd8] sm:$0xff]
  %v54 = vld [vmem:[%s1 + $0xe0] sm:$0xf]
  %v55 = vld [vmem:[%s1 + $0xe4] sm:$0xff]
  %v56 = vld [vmem:[%s1 + $0xec] sm:$0xf]
  %v57 = vld [vmem:[%s1 + $0xf0] sm:$0xff]
  %v58 = vld [vmem:[%s1 + $0xf8] sm:$0xf]
  %v59 = vld [vmem:[%s1 + $0xfc] sm:$0xff]
  %v60 = vld [vmem:[%s1 + $0x104] sm:$0xf]
  %v61 = vld [vmem:[%s1 + $0x108] sm:$0xff]
  %v62 = vld [vmem:[%s1 + $0x110] sm:$0xf]
  %v63 = vld [vmem:[%s1 + $0x114] sm:$0xff]
  %v64 = vld [vmem:[%s1 + $0x11c] sm:$0xf]
  %v65 = vld [vmem:[%s1 + $0x120] sm:$0xff]
  %v66 = vld [vmem:[%s1 + $0x128] sm:$0xf]
  %v67 = vld [vmem:[%s1 + $0x12c] sm:$0xff]
  %v68 = vld [vmem:[%s1 + $0x134] sm:$0xf]
  %v69 = vld [vmem:[%s1 + $0x138] sm:$0xff]
  %v70 = vld [vmem:[%s1 + $0x140] sm:$0xf]
  %v71 = vld [vmem:[%s1 + $0x144] sm:$0xff]
  %v72 = vld [vmem:[%s1 + $0x14c] sm:$0xf]
  %v75 = vunpack.c.l.s4 1966171168
  %v76 = vunpack.c.0.s8 %v75
  %v77 = vlaneseq
  %v78 = vshrl.u32 %v77, 7
  %v79 = vsub.s32 %v76, %v78
  %v80 = vrot.slane %v16, %v79
  %v81 = vcombine.high %v80, %v80
  %v83 = vunpack.c.l.s4 1966171168
  %v84 = vunpack.c.0.s8 %v83
  %v85 = vlaneseq
  %v86 = vshrl.u32 %v85, 7
  %v87 = vsub.s32 %v84, %v86
  %v88 = vrot.slane %v80, %v87
  %v90 = vunpack.c.l.s4 1966171168
  %v91 = vunpack.c.0.s8 %v90
  %v92 = vlaneseq
  %v93 = vshrl.u32 %v92, 7
  %v94 = vsub.s32 %v91, %v93
  %v95 = vrot.slane %v81, %v94
  %v153 = vunpack.c.l.b16 %v17
  %v154 = vunpack.c.h.b16 %v17
  %v155 = vunpack.c.l.b16 %v18
  %v156 = vunpack.c.l.b16 %v19
  %v157 = vunpack.c.h.b16 %v19
  %v158 = vunpack.c.l.b16 %v20
  %v159 = vunpack.c.l.b16 %v21
  %v160 = vunpack.c.h.b16 %v21
  %v161 = vunpack.c.l.b16 %v22
  %v162 = vunpack.c.l.b16 %v23
  %v163 = vunpack.c.h.b16 %v23
  %v164 = vunpack.c.l.b16 %v24
  %v165 = vunpack.c.l.b16 %v25
  %v166 = vunpack.c.h.b16 %v25
  %v167 = vunpack.c.l.b16 %v26
  %v168 = vunpack.c.l.b16 %v27
  %v169 = vunpack.c.h.b16 %v27
  %v170 = vunpack.c.l.b16 %v28
  %v171 = vunpack.c.l.b16 %v29
  %v172 = vunpack.c.h.b16 %v29
  %v173 = vunpack.c.l.b16 %v30
  %v174 = vunpack.c.l.b16 %v31
  %v175 = vunpack.c.h.b16 %v31
  %v176 = vunpack.c.l.b16 %v32
  %v177 = vunpack.c.l.b16 %v33
  %v178 = vunpack.c.h.b16 %v33
  %v179 = vunpack.c.l.b16 %v34
  %v180 = vunpack.c.l.b16 %v35
  %v181 = vunpack.c.h.b16 %v35
  %v182 = vunpack.c.l.b16 %v36
  %v183 = vunpack.c.l.b16 %v37
  %v184 = vunpack.c.h.b16 %v37
  %v185 = vunpack.c.l.b16 %v38
  %v186 = vunpack.c.l.b16 %v39
  %v187 = vunpack.c.h.b16 %v39
  %v188 = vunpack.c.l.b16 %v40
  %v189 = vunpack.c.l.b16 %v41
  %v190 = vunpack.c.h.b16 %v41
  %v191 = vunpack.c.l.b16 %v42
  %v192 = vunpack.c.l.b16 %v43
  %v193 = vunpack.c.h.b16 %v43
  %v194 = vunpack.c.l.b16 %v44
  %v195 = vunpack.c.l.b16 %v45
  %v196 = vunpack.c.h.b16 %v45
  %v197 = vunpack.c.l.b16 %v46
  %v198 = vunpack.c.l.b16 %v47
  %v199 = vunpack.c.h.b16 %v47
  %v200 = vunpack.c.l.b16 %v48
  %v201 = vunpack.c.l.b16 %v49
  %v202 = vunpack.c.h.b16 %v49
  %v203 = vunpack.c.l.b16 %v50
  %v204 = vunpack.c.l.b16 %v51
  %v205 = vunpack.c.h.b16 %v51
  %v206 = vunpack.c.l.b16 %v52
  %v207 = vunpack.c.l.b16 %v53
  %v208 = vunpack.c.h.b16 %v53
  %v209 = vunpack.c.l.b16 %v54
  %v210 = vunpack.c.l.b16 %v55
  %v211 = vunpack.c.h.b16 %v55
  %v212 = vunpack.c.l.b16 %v56
  %v213 = vunpack.c.l.b16 %v57
  %v214 = vunpack.c.h.b16 %v57
  %v215 = vunpack.c.l.b16 %v58
  %v216 = vunpack.c.l.b16 %v59
  %v217 = vunpack.c.h.b16 %v59
  %v218 = vunpack.c.l.b16 %v60
  %v219 = vunpack.c.l.b16 %v61
  %v220 = vunpack.c.h.b16 %v61
  %v221 = vunpack.c.l.b16 %v62
  %v222 = vunpack.c.l.b16 %v63
  %v223 = vunpack.c.h.b16 %v63
  %v224 = vunpack.c.l.b16 %v64
  %v225 = vunpack.c.l.b16 %v65
  %v226 = vunpack.c.h.b16 %v65
  %v227 = vunpack.c.l.b16 %v66
  %v228 = vunpack.c.l.b16 %v67
  %v229 = vunpack.c.h.b16 %v67
  %v230 = vunpack.c.l.b16 %v68
  %v231 = vunpack.c.l.b16 %v69
  %v232 = vunpack.c.h.b16 %v69
  %v233 = vunpack.c.l.b16 %v70
  %v234 = vunpack.c.l.b16 %v71
  %v235 = vunpack.c.h.b16 %v71
  %v236 = vunpack.c.l.b16 %v72
  %v237 = vpack.c.b16 %v156, %v153
  %v238 = vpack.c.b16 %v157, %v154
  %v239 = vpack.c.b16 %v158, %v155
  %v240 = vpack.c.b16 %v162, %v159
  %v241 = vpack.c.b16 %v163, %v160
  %v242 = vpack.c.b16 %v164, %v161
  %v243 = vpack.c.b16 %v168, %v165
  %v244 = vpack.c.b16 %v169, %v166
  %v245 = vpack.c.b16 %v170, %v167
  %v246 = vpack.c.b16 %v174, %v171
  %v247 = vpack.c.b16 %v175, %v172
  %v248 = vpack.c.b16 %v176, %v173
  %v249 = vpack.c.b16 %v180, %v177
  %v250 = vpack.c.b16 %v181, %v178
  %v251 = vpack.c.b16 %v182, %v179
  %v252 = vpack.c.b16 %v186, %v183
  %v253 = vpack.c.b16 %v187, %v184
  %v254 = vpack.c.b16 %v188, %v185
  %v255 = vpack.c.b16 %v192, %v189
  %v256 = vpack.c.b16 %v193, %v190
  %v257 = vpack.c.b16 %v194, %v191
  %v258 = vpack.c.b16 %v198, %v195
  %v259 = vpack.c.b16 %v199, %v196
  %v260 = vpack.c.b16 %v200, %v197
  %v261 = vpack.c.b16 %v204, %v201
  %v262 = vpack.c.b16 %v205, %v202
  %v263 = vpack.c.b16 %v206, %v203
  %v264 = vpack.c.b16 %v210, %v207
  %v265 = vpack.c.b16 %v211, %v208
  %v266 = vpack.c.b16 %v212, %v209
  %v267 = vpack.c.b16 %v216, %v213
  %v268 = vpack.c.b16 %v217, %v214
  %v269 = vpack.c.b16 %v218, %v215
  %v270 = vpack.c.b16 %v222, %v219
  %v271 = vpack.c.b16 %v223, %v220
  %v272 = vpack.c.b16 %v224, %v221
  %v273 = vpack.c.b16 %v228, %v225
  %v274 = vpack.c.b16 %v229, %v226
  %v275 = vpack.c.b16 %v230, %v227
  %v276 = vpack.c.b16 %v234, %v231
  %v277 = vpack.c.b16 %v235, %v232
  %v278 = vpack.c.b16 %v236, %v233
  %vm321 = vcmask 785408
  %v323 = vsel %vm321, %v95, 0
  %325 = vmatprep.subr.bf16.mxu0 %v238
  %326 = vmatpush1.bf16.msra.mxu0 %v237
  %327 = vmatprep.subr.bf16.mxu0 %v241
  %328 = vmatpush1.bf16.msra.mxu0 %v240
  %329 = vmatprep.subr.bf16.mxu0 %v244
  %330 = vmatpush1.bf16.msra.mxu0 %v243
  %331 = vmatprep.subr.bf16.mxu0 %v247
  %332 = vmatpush1.bf16.msra.mxu0 %v246
  %333 = vmatprep.subr.bf16.mxu0 %v250
  %334 = vmatpush1.bf16.msra.mxu0 %v249
  %335 = vmatprep.subr.bf16.mxu0 %v253
  %336 = vmatpush1.bf16.msra.mxu0 %v252
  %337 = vmatprep.subr.bf16.mxu0 %v256
  %338 = vmatpush1.bf16.msra.mxu0 %v255
  %339 = vmatprep.subr.bf16.mxu0 %v259
  %340 = vmatpush1.bf16.msra.mxu0 %v258
  %341 = vmatprep.subr.bf16.mxu0 %v262
  %342 = vmatpush1.bf16.msra.mxu0 %v261
  %343 = vmatprep.subr.bf16.mxu0 %v265
  %344 = vmatpush1.bf16.msra.mxu0 %v264
  %345 = vmatprep.subr.bf16.mxu0 %v268
  %346 = vmatpush1.bf16.msra.mxu0 %v267
  %347 = vmatprep.subr.bf16.mxu0 %v271
  %348 = vmatpush1.bf16.msra.mxu0 %v270
  %349 = vmatprep.subr.bf16.mxu0 %v274
  %350 = vmatpush1.bf16.msra.mxu0 %v273
  %351 = vmatprep.subr.bf16.mxu0 %v277
  %352 = vmatpush1.bf16.msra.mxu0 %v276
  %353 = vmatprep.subr.bf16.mxu0 0
  %354 = vmatpush1.bf16.msra.mxu0 0
  %355 = vmatprep.subr.bf16.mxu0 0
  %356 = vmatpush1.bf16.msra.mxu0 0
  %357 = vmatprep.mubr.bf16.mxu0 %v323
  %358 = vmatmul.mubr.bf16.gmra.mrb[0].mxu0 %v88
  %v359 = vpop.f32.mrb[0].mxu0
  %v360 = vadd.f32 0.0, %v359
  %v361 = vpop.f32.mrb[0].mxu0
  %v362 = vadd.f32 0.0, %v361
  %v363 = vpop.f32.mrb[0].mxu0
  %v364 = vpop.f32.mrb[0].mxu0
  %365 = vdwg.mxu0
  %366 = vmatprep.subr.bf16.mxu0 0
  %367 = vmatpush1.bf16.msra.mxu0 %v239
  %368 = vmatprep.subr.bf16.mxu0 0
  %369 = vmatpush1.bf16.msra.mxu0 %v242
  %370 = vmatprep.subr.bf16.mxu0 0
  %371 = vmatpush1.bf16.msra.mxu0 %v245
  %372 = vmatprep.subr.bf16.mxu0 0
  %373 = vmatpush1.bf16.msra.mxu0 %v248
  %374 = vmatprep.subr.bf16.mxu0 0
  %375 = vmatpush1.bf16.msra.mxu0 %v251
  %376 = vmatprep.subr.bf16.mxu0 0
  %377 = vmatpush1.bf16.msra.mxu0 %v254
  %378 = vmatprep.subr.bf16.mxu0 0
  %379 = vmatpush1.bf16.msra.mxu0 %v257
  %380 = vmatprep.subr.bf16.mxu0 0
  %381 = vmatpush1.bf16.msra.mxu0 %v260
  %382 = vmatprep.subr.bf16.mxu0 0
  %383 = vmatpush1.bf16.msra.mxu0 %v263
  %384 = vmatprep.subr.bf16.mxu0 0
  %385 = vmatpush1.bf16.msra.mxu0 %v266
  %386 = vmatprep.subr.bf16.mxu0 0
  %387 = vmatpush1.bf16.msra.mxu0 %v269
  %388 = vmatprep.subr.bf16.mxu0 0
  %389 = vmatpush1.bf16.msra.mxu0 %v272
  %390 = vmatprep.subr.bf16.mxu0 0
  %391 = vmatpush1.bf16.msra.mxu0 %v275
  %392 = vmatprep.subr.bf16.mxu0 0
  %393 = vmatpush1.bf16.msra.mxu0 %v278
  %394 = vmatprep.subr.bf16.mxu0 0
  %395 = vmatpush1.bf16.msra.mxu0 0
  %396 = vmatprep.subr.bf16.mxu0 0
  %397 = vmatpush1.bf16.msra.mxu0 0
  %398 = vmatprep.mubr.bf16.mxu0 %v323
  %399 = vmatmul.mubr.bf16.gmra.mrb[0].mxu0 %v88
  %v400 = vpop.f32.mrb[0].mxu0
  %v401 = vadd.f32 0.0, %v400
  %v402 = vpop.f32.mrb[0].mxu0
  %v403 = vpop.f32.mrb[0].mxu0
  %v404 = vpop.f32.mrb[0].mxu0
  %405 = vdwg.mxu0
  %v407 = vlaneseq
  %v408 = vshrl.u32 %v407, 7
  %v409 = vsub.s32 0, %v408
  %v410 = vrot.slane %v15, %v409
  %v411 = vlaneseq
  %v412 = vshrl.u32 %v411, 7
  %v413 = vsub.s32 1, %v412
  %v414 = vrot.slane %v15, %v413
  %v415 = vlaneseq
  %v416 = vshrl.u32 %v415, 7
  %v417 = vsub.s32 2, %v416
  %v418 = vrot.slane %v15, %v417
  %v422 = vadd.f32 %v410, %v360
  %v423 = vadd.f32 %v414, %v362
  %v424 = vadd.f32 %v418, %v401
  %v428 = vcombine.low %v422, %v423
  %v430 = vunpack.c.l.s4 1983009808
  %v431 = vunpack.c.0.s8 %v430
  %v432 = vlaneseq
  %v433 = vshrl.u32 %v432, 7
  %v434 = vsub.s32 %v431, %v433
  %v435 = vrot.slane %v428, %v434
  %v437 = vunpack.c.l.s4 1983009808
  %v438 = vunpack.c.0.s8 %v437
  %v439 = vlaneseq
  %v440 = vshrl.u32 %v439, 7
  %v441 = vsub.s32 %v438, %v440
  %v442 = vrot.slane %v424, %v441
  %v443 = vcombine.low %v435, %v442
  %445 = vst [vmem:[%s3] sm:$0x3f] %v443
  // Predicated region
  $region14: #{smpl_forward.2} parent=0 // pred_check
    _
  $region15: #{smpl_forward.2} parent=0 // pred_check_branch
    %447 = sbr.rel (0) target = $region17
  $region16: #{smpl_forward.2} parent=0 // pred_region
    _
  $region17: #{smpl_forward.2} parent=0 // pred_fallthru
    _
  // Predicated region
  $region18: #{smpl_forward.2} parent=0 // pred_check
    _
  $region19: #{smpl_forward.2} parent=0 // pred_check_branch
    %449 = sbr.rel (0) target = $region21
  $region20: #{smpl_forward.2} parent=0 // pred_region
    _
  $region21: #{smpl_forward.2} parent=0 // pred_fallthru
    _

// kernel: smpl_forward.3
$region0: #{smpl_forward.3}
  #allocation0 [shape = 'u32[]', space=smem, size = 0x4, offset = 0x4, fixed_abs, tag = 'smem constant byte address 0x4 - core index']
  #allocation1 [shape = 'u32[144,128]{1,0:T(1,128)}', space=vmem, size = 0x12000, scoped, tag = 'internal scratch']
  %s0 = inlined_call_operand.vmem [shape: f32[24,24], index: 0, kind: input, shape index: {}]
  %s1 = inlined_call_operand.vmem [shape: f32[24,128], index: 1, kind: input, shape index: {}]
  %s2 = inlined_call_operand.vmem [shape: f32[2,3,128], index: 2, kind: input, shape index: {}]
  %s3 = inlined_call_operand.vmem [shape: f32[2,3,128], index: 3, kind: output, shape index: {}]
  %s4 = sld [smem:[#allocation0]]
  $region22: #{smpl_forward.3} parent=0
    _
  %s6 = ssub.s32 1, %s4
  %s7 = scalar_select 0, %s6, %s4
  // Predicated region
  $region2: #{smpl_forward.3} parent=0 // pred_check
    _
  $region3: #{smpl_forward.3} parent=0 // pred_check_branch
    %9 = sbr.rel (0) target = $region5
  $region4: #{smpl_forward.3} parent=0 // pred_region
    _
  $region5: #{smpl_forward.3} parent=0 // pred_fallthru
    _
  // Predicated region
  $region6: #{smpl_forward.3} parent=0 // pred_check
    _
  $region7: #{smpl_forward.3} parent=0 // pred_check_branch
    %11 = sbr.rel (0) target = $region9
  $region8: #{smpl_forward.3} parent=0 // pred_region
    _
  $region9: #{smpl_forward.3} parent=0 // pred_fallthru
    _
  // Predicated region
  $region10: #{smpl_forward.3} parent=0 // pred_check
    _
  $region11: #{smpl_forward.3} parent=0 // pred_check_branch
    %13 = sbr.rel (0) target = $region13
  $region12: #{smpl_forward.3} parent=0 // pred_region
    _
  $region13: #{smpl_forward.3} parent=0 // pred_fallthru
    _
  %v14 = vld [vmem:[%s0] sm:$0xff]
  %v15 = vld [vmem:[%s0 + $0x8] sm:$0xff]
  %v16 = vld [vmem:[%s0 + $0x10] sm:$0xff]
  %v17 = vld [vmem:[%s1] sm:$0xff]
  %v18 = vld [vmem:[%s1 + $0x8] sm:$0xff]
  %v19 = vld [vmem:[%s1 + $0x10] sm:$0xff]
  %vm20 = vcmask 195584
  %v22 = vsel %vm20, %v14, 0
  %v25 = vsel %vm20, %v15, 0
  %v28 = vsel %vm20, %v16, 0
  %30 = vmatprep.subr.mxu0 0.0
  %31 = vmatpush1.msra.mxu0 %v17
  %32 = vmatprep.subr.mxu0 0.0
  %33 = vmatpush1.msra.mxu0 %v18
  %34 = vmatprep.subr.mxu0 0.0
  %35 = vmatpush1.msra.mxu0 %v19
  %36 = vmatprep.subr.mxu0 0.0
  %37 = vmatpush1.msra.mxu0 0.0
  %38 = vmatprep.subr.mxu0 0.0
  %39 = vmatpush1.msra.mxu0 0.0
  %40 = vmatprep.subr.mxu0 0.0
  %41 = vmatpush1.msra.mxu0 0.0
  %42 = vmatprep.subr.mxu0 0.0
  %43 = vmatpush1.msra.mxu0 0.0
  %44 = vmatprep.subr.mxu0 0.0
  %45 = vmatpush1.msra.mxu0 0.0
  %46 = vmatprep.subr.mxu0 0.0
  %47 = vmatpush1.msra.mxu0 0.0
  %48 = vmatprep.subr.mxu0 0.0
  %49 = vmatpush1.msra.mxu0 0.0
  %50 = vmatprep.subr.mxu0 0.0
  %51 = vmatpush1.msra.mxu0 0.0
  %52 = vmatprep.subr.mxu0 0.0
  %53 = vmatpush1.msra.mxu0 0.0
  %54 = vmatprep.subr.mxu0 0.0
  %55 = vmatpush1.msra.mxu0 0.0
  %56 = vmatprep.subr.mxu0 0.0
  %57 = vmatpush1.msra.mxu0 0.0
  %58 = vmatprep.subr.mxu0 0.0
  %59 = vmatpush1.msra.mxu0 0.0
  %60 = vmatprep.subr.mxu0 0.0
  %61 = vmatpush1.msra.mxu0 0.0
  %62 = vmatprep.subr.mxu0 0.0
  %63 = vmatpush1.msra.mxu0 0.0
  %64 = vmatprep.subr.mxu0 0.0
  %65 = vmatpush1.msra.mxu0 0.0
  %66 = vmatprep.subr.mxu0 0.0
  %67 = vmatpush1.msra.mxu0 0.0
  %68 = vmatprep.subr.mxu0 0.0
  %69 = vmatpush1.msra.mxu0 0.0
  %70 = vmatprep.subr.mxu0 0.0
  %71 = vmatpush1.msra.mxu0 0.0
  %72 = vmatprep.subr.mxu0 0.0
  %73 = vmatpush1.msra.mxu0 0.0
  %74 = vmatprep.subr.mxu0 0.0
  %75 = vmatpush1.msra.mxu0 0.0
  %76 = vmatprep.subr.mxu0 0.0
  %77 = vmatpush1.msra.mxu0 0.0
  %78 = vmatprep.subr.mxu0 0.0
  %79 = vmatpush1.msra.mxu0 0.0
  %80 = vmatprep.subr.mxu0 0.0
  %81 = vmatpush1.msra.mxu0 0.0
  %82 = vmatprep.subr.mxu0 0.0
  %83 = vmatpush1.msra.mxu0 0.0
  %84 = vmatprep.subr.mxu0 0.0
  %85 = vmatpush1.msra.mxu0 0.0
  %86 = vmatprep.subr.mxu0 0.0
  %87 = vmatpush1.msra.mxu0 0.0
  %88 = vmatprep.subr.mxu0 0.0
  %89 = vmatpush1.msra.mxu0 0.0
  %90 = vmatprep.subr.mxu0 0.0
  %91 = vmatpush1.msra.mxu0 0.0
  %92 = vmatprep.subr.mxu0 0.0
  %93 = vmatpush1.msra.mxu0 0.0
  %94 = vmatprep.mubr.f32.mxu0 0.0
  %95 = vmatmul.mubr.f32.gmra.mrb[0].mxu0 %v22
  %v96 = vpop.f32.mrb[0].mxu0
  %v97 = vadd.f32 0.0, %v96
  %v98 = vpop.f32.mrb[0].mxu0
  %99 = vmatprep.mubr.f32.mxu0 0.0
  %100 = vmatmul.mubr.f32.gmra.mrb[0].mxu0 %v25
  %v101 = vpop.f32.mrb[0].mxu0
  %v102 = vadd.f32 0.0, %v101
  %v103 = vpop.f32.mrb[0].mxu0
  %104 = vmatprep.mubr.f32.mxu0 0.0
  %105 = vmatmul.mubr.f32.gmra.mrb[0].mxu0 %v28
  %v106 = vpop.f32.mrb[0].mxu0
  %v107 = vadd.f32 0.0, %v106
  %v108 = vpop.f32.mrb[0].mxu0
  %109 = vdwg.mxu0
  %v110 = vld [vmem:[%s2] sm:$0x7]
  %vm111 = vcmask 1042432
  %v112 = vsel %vm111, %v110, 1.0
  %v114 = vrot.slane %v112, 4
  %vm116 = vcmask 1043456
  %v117 = vsel %vm116, %v112, %v114
  %v118 = vmul.f32 %v97, %v117
  %v119 = vmul.f32 %v102, %v112
  %v120 = vsel %vm116, %v118, 0.0
  %v121 = vrot.slane %v120, 4
  %v122 = vadd.f32 %v120, %v121
  %v123 = vrot.slane %v122, 2
  %v124 = vadd.f32 %v122, %v123
  %v125 = vrot.slane %v124, 1
  %v126 = vadd.f32 %v124, %v125
  %v128 = vrot.slane %v118, 4
  %v130 = vsel %vm116, %v128, 0.0
  %v131 = vrot.slane %v130, 4
  %v132 = vadd.f32 %v130, %v131
  %v133 = vrot.slane %v132, 2
  %v134 = vadd.f32 %v132, %v133
  %v135 = vrot.slane %v134, 1
  %v136 = vadd.f32 %v134, %v135
  %v137 = vsel %vm116, %v119, 0.0
  %v138 = vrot.slane %v137, 4
  %v139 = vadd.f32 %v137, %v138
  %v140 = vrot.slane %v139, 2
  %v141 = vadd.f32 %v139, %v140
  %v142 = vrot.slane %v141, 1
  %v143 = vadd.f32 %v141, %v142
  %vm144 = vcmask 1040384
  %v145 = vsel %vm144, %v126, %v136
  %vm146 = vcmask 1041408
  %v147 = vsel %vm146, %v145, %v143
  %148 = vst [vmem:[%s3] sm:$0x7] %v147
  %s149 = scalar_lea.vmem %s2, 4
  %v150 = vld [vmem:[%s149] sm:$0x7]
  %v151 = vsel %vm111, %v150, 1.0
  %v153 = vrot.slane %v151, 4
  %v155 = vsel %vm116, %v151, %v153
  %v157 = vrot.slane %v155, 4
  %v158 = vsel %vm116, %v157, %v153
  %v161 = vmul.f32 %v102, %v157
  %v162 = vmul.f32 %v107, %v158
  %v164 = vrot.slane %v161, 4
  %v166 = vsel %vm116, %v164, 0.0
  %v167 = vrot.slane %v166, 4
  %v168 = vadd.f32 %v166, %v167
  %v169 = vrot.slane %v168, 2
  %v170 = vadd.f32 %v168, %v169
  %v171 = vrot.slane %v170, 1
  %v172 = vadd.f32 %v170, %v171
  %v173 = vsel %vm116, %v162, 0.0
  %v174 = vrot.slane %v173, 4
  %v175 = vadd.f32 %v173, %v174
  %v176 = vrot.slane %v175, 2
  %v177 = vadd.f32 %v175, %v176
  %v178 = vrot.slane %v177, 1
  %v179 = vadd.f32 %v177, %v178
  %v181 = vrot.slane %v162, 4
  %v183 = vsel %vm116, %v181, 0.0
  %v184 = vrot.slane %v183, 4
  %v185 = vadd.f32 %v183, %v184
  %v186 = vrot.slane %v185, 2
  %v187 = vadd.f32 %v185, %v186
  %v188 = vrot.slane %v187, 1
  %v189 = vadd.f32 %v187, %v188
  %v190 = vsel %vm144, %v172, %v179
  %v191 = vsel %vm146, %v190, %v189
  %s192 = scalar_lea.vmem %s3, 4
  %193 = vst [vmem:[%s192] sm:$0x7] %v191
  // Predicated region
  $region14: #{smpl_forward.3} parent=0 // pred_check
    _
  $region15: #{smpl_forward.3} parent=0 // pred_check_branch
    %195 = sbr.rel (0) target = $region17
  $region16: #{smpl_forward.3} parent=0 // pred_region
    _
  $region17: #{smpl_forward.3} parent=0 // pred_fallthru
    _
  // Predicated region
  $region18: #{smpl_forward.3} parent=0 // pred_check
    _
  $region19: #{smpl_forward.3} parent=0 // pred_check_branch
    %197 = sbr.rel (0) target = $region21
  $region20: #{smpl_forward.3} parent=0 // pred_region
    _
  $region21: #{smpl_forward.3} parent=0 // pred_fallthru
    _

</llo_original>
